<compile_context>
chip_gen: v5e
topology: v5e:2x2
jax: 0.10.0
libtpu: 0.0.40
codegen_flags: <defaults>
</compile_context>

<pallas_src>
import jax
import jax.numpy as jnp
from jax.experimental import pallas as pl
from jax.experimental.pallas import tpu as pltpu

ENTROPY_LOSS_COEF = 0.0002
EPS = 1e-12

LANES = 512                  # lane-dense last dim (multiple of 128)
SUBLANES = 8
SLAB = SUBLANES * LANES      # elements per (8, LANES) slab


def _make_entropy_kernel(num_slabs, slabs_per_block):
    """Kernel closure over the static slab geometry."""

    def kernel(w_ref, out_ref, acc_ref):
        p = pl.program_id(0)                 # partition axis ("parallel")
        k = pl.program_id(1)                 # reduction axis ("arbitrary")
        steps = pl.num_programs(1)

        @pl.when(k == 0)
        def _init():
            acc_ref[...] = jnp.zeros_like(acc_ref)

        # Hot path: VPU mul/add + EUP log; leading-axis reduce is vreg adds.
        w = w_ref[...].astype(jnp.float32)           # (slabs_per_block, 8, LANES)
        term = w * (-jnp.log(w + jnp.float32(EPS)))

        # Valid slabs in this *logical* block (the grid may overrun num_slabs).
        valid = num_slabs - (p * steps + k) * slabs_per_block

        @pl.when(valid >= slabs_per_block)
        def _full_block():
            acc_ref[...] += jnp.sum(term, axis=0)    # (8, LANES) accumulator

        @pl.when(valid < slabs_per_block)
        def _edge_block():
            # Partial (0 < valid < spb) or fully-overrun (valid <= 0) block:
            # mask at slab granularity. Garbage/NaN from the padded region is
            # discarded by the select, so the contribution is exact.
            slab_id = jax.lax.broadcasted_iota(jnp.int32, term.shape, 0)
            acc_ref[...] += jnp.sum(
                jnp.where(slab_id < valid, term, 0.0), axis=0
            )

        @pl.when(k == steps - 1)
        def _finalize():
            # Single cross-lane XLU reduce + coefficient scale, once/partition.
            out_ref[0, 0] = jnp.sum(acc_ref[...]) * jnp.float32(ENTROPY_LOSS_COEF)

    return kernel


def entropy_loss(mem_weight, *, target_block_bytes=2 * 1024 * 1024):
    """Pallas equivalent of EntropyLoss.forward(mem_weight)."""
    w = jnp.asarray(mem_weight)
    if not jnp.issubdtype(w.dtype, jnp.floating):
        w = w.astype(jnp.float32)
    flat = w.reshape(-1)
    total = int(flat.shape[0])
    itemsize = jnp.dtype(flat.dtype).itemsize

    # Pad only up to one slab boundary (zeros contribute exactly 0 to the sum).
    # Grid overrun beyond num_slabs is masked in-kernel, not padded here.
    num_slabs = max(1, pl.cdiv(total, SLAB))
    padded_total = num_slabs * SLAB
    if padded_total != total:
        flat = jnp.pad(flat, (0, padded_total - total))
    w3d = flat.reshape(num_slabs, SUBLANES, LANES)   # contiguous -> free reshape

    # Largest lane-dense block that fits the per-buffer byte budget.
    slabs_per_block = max(1, target_block_bytes // (SLAB * itemsize))
    if num_slabs <= slabs_per_block:
        partitions, steps, spb = 1, 1, num_slabs     # single grid step
    else:
        partitions = 2                               # 2-TC split on v7x; cheap loop elsewhere
        spb = slabs_per_block
        steps = pl.cdiv(num_slabs, partitions * spb)

    # Last block index that still starts inside the array; overrunning grid
    # steps are clamped here (their contribution is masked to zero in-kernel).
    last_block = pl.cdiv(num_slabs, spb) - 1

    def in_index_map(p, k):
        return (jnp.minimum(p * steps + k, last_block), 0, 0)

    partials = pl.pallas_call(
        _make_entropy_kernel(num_slabs, spb),
        out_shape=jax.ShapeDtypeStruct((partitions, 1), jnp.float32),
        grid_spec=pltpu.PrefetchScalarGridSpec(
            num_scalar_prefetch=0,
            grid=(partitions, steps),
            in_specs=[pl.BlockSpec((spb, SUBLANES, LANES), in_index_map)],
            out_specs=pl.BlockSpec(
                (1, 1), lambda p, k: (p, 0), memory_space=pltpu.SMEM
            ),
            scratch_shapes=[pltpu.VMEM((SUBLANES, LANES), jnp.float32)],
        ),
        compiler_params=pltpu.CompilerParams(
            dimension_semantics=("parallel", "arbitrary"),
        ),
    )(w3d)
    return jnp.sum(partials)


def _reference(mem_weight):
    w = jnp.asarray(mem_weight).astype(jnp.float32)
    return (-w * jnp.log(w + EPS)).sum() * ENTROPY_LOSS_COEF


if __name__ == "__main__":
    key = jax.random.PRNGKey(0)
    k1, k2, k3 = jax.random.split(key, 3)

    # 1) MemoryDefense-like memory addressing weights: (batch*queries, slots),
    #    softmax over slots. Small, slab-aligned input -> single grid step.
    logits = jax.random.normal(k1, (32, 256), dtype=jnp.float32)
    mem_weight = jax.nn.softmax(logits, axis=-1)
    loss = entropy_loss(mem_weight)
    jax.block_until_ready(loss)
    ref = _reference(mem_weight)
    assert jnp.allclose(loss, ref, rtol=1e-4, atol=1e-6), (loss, ref)

    # 2) bf16 ingestion (halves HBM traffic); kernel accumulates in f32.
    mem_weight_bf16 = mem_weight.astype(jnp.bfloat16)
    loss_bf16 = entropy_loss(mem_weight_bf16)
    jax.block_until_ready(loss_bf16)
    ref_bf16 = _reference(mem_weight_bf16)
    assert jnp.allclose(loss_bf16, ref_bf16, rtol=1e-4, atol=1e-6), (loss_bf16, ref_bf16)

    # 3) Ragged, sub-slab shape exercises the zero-padding tail path.
    ragged = jax.random.uniform(k2, (5, 100), dtype=jnp.float32,
                                minval=1e-4, maxval=1.0)
    loss_r = entropy_loss(ragged)
    jax.block_until_ready(loss_r)
    assert jnp.allclose(loss_r, _reference(ragged), rtol=1e-4, atol=1e-6)

    # 4) Force the multi-step / 2-partition pipeline with an odd slab count
    #    (9 slabs, 2 slabs per block): exercises init/accumulate/finalize plus
    #    the partially-valid and fully-overrun masked edge blocks.
    big = jax.nn.softmax(jax.random.normal(k3, (72, 512), dtype=jnp.float32),
                         axis=-1)
    loss_b = entropy_loss(big, target_block_bytes=SLAB * 8)  # 2 slabs/block (f32)
    jax.block_until_ready(loss_b)
    assert jnp.allclose(loss_b, _reference(big), rtol=1e-4, atol=1e-6)

    print("KERNEL_OK")
</pallas_src>

<mosaic_0001>
module attributes {stable_mosaic.version = 11 : i64} {
  func.func @kernel(%arg0: i32, %arg1: i32, %arg2: memref<2x8x512xf32, #tpu.memory_space<vmem>>, %arg3: memref<1x1xf32, #tpu.memory_space<smem>>, %arg4: memref<8x512xf32, #tpu.memory_space<vmem>>) attributes {dimension_semantics = [#tpu.dimension_semantics<parallel>, #tpu.dimension_semantics<arbitrary>], iteration_bounds = array<i64: 1, 1>, scalar_prefetch = 0 : i64, scratch_operands = 1 : i64, tpu.core_type = #tpu.core_type<tc>, window_params = [{transform_indices = @transform_0, window_bounds = array<i64: 2, 8, 512>}, {transform_indices = @transform_1, window_bounds = array<i64: 1, 1>}]} {
    %c0_i32 = arith.constant 0 : i32
    %0 = arith.cmpi eq, %arg1, %c0_i32 : i32
    %1 = arith.extui %0 : i1 to i32
    %c0_i32_0 = arith.constant 0 : i32
    %2 = arith.cmpi ne, %1, %c0_i32_0 : i32
    scf.if %2 {
      %cst_11 = arith.constant 0.000000e+00 : f32
      %23 = vector.broadcast %cst_11 : f32 to vector<8x512xf32>
      %c0_12 = arith.constant 0 : index
      %c0_13 = arith.constant 0 : index
      %24 = vector.load %arg4[%c0_12, %c0_13] : memref<8x512xf32, #tpu.memory_space<vmem>>, vector<8x512xf32>
      tpu.vector_store %arg4[%c0_12, %c0_13], %23 {strides = array<i32>} : memref<8x512xf32, #tpu.memory_space<vmem>>, vector<8x512xf32>,
    } else {
    }
    %c0 = arith.constant 0 : index
    %c0_1 = arith.constant 0 : index
    %c0_2 = arith.constant 0 : index
    %3 = vector.load %arg2[%c0, %c0_1, %c0_2] : memref<2x8x512xf32, #tpu.memory_space<vmem>>, vector<2x8x512xf32>
    %cst = arith.constant 9.99999996E-13 : f32
    %4 = vector.broadcast %cst : f32 to vector<2x8x512xf32>
    %5 = arith.addf %3, %4 : vector<2x8x512xf32>
    %6 = math.log %5 : vector<2x8x512xf32>
    %cst_3 = arith.constant 0.000000e+00 : f32
    %7 = vector.broadcast %cst_3 : f32 to vector<2x8x512xf32>
    %8 = arith.subf %7, %6 : vector<2x8x512xf32>
    %9 = arith.mulf %3, %8 : vector<2x8x512xf32>
    %c1_i32 = arith.constant 1 : i32
    %10 = arith.muli %arg0, %c1_i32 : i32
    %11 = arith.addi %10, %arg1 : i32
    %c2_i32 = arith.constant 2 : i32
    %12 = arith.muli %11, %c2_i32 : i32
    %c2_i32_4 = arith.constant 2 : i32
    %13 = arith.subi %c2_i32_4, %12 : i32
    %c2_i32_5 = arith.constant 2 : i32
    %14 = arith.cmpi sge, %13, %c2_i32_5 : i32
    %15 = arith.extui %14 : i1 to i32
    %c0_i32_6 = arith.constant 0 : i32
    %16 = arith.cmpi ne, %15, %c0_i32_6 : i32
    scf.if %16 {
      %c0_11 = arith.constant 0 : index
      %c0_12 = arith.constant 0 : index
      %23 = vector.load %arg4[%c0_11, %c0_12] : memref<8x512xf32, #tpu.memory_space<vmem>>, vector<8x512xf32>
      %cst_13 = arith.constant dense<0.000000e+00> : vector<8x512xf32>
      %24 = vector.multi_reduction <add>, %9, %cst_13 [0] : vector<2x8x512xf32> to vector<8x512xf32>
      %25 = arith.addf %23, %24 : vector<8x512xf32>
      %c0_14 = arith.constant 0 : index
      %c0_15 = arith.constant 0 : index
      %26 = vector.load %arg4[%c0_14, %c0_15] : memref<8x512xf32, #tpu.memory_space<vmem>>, vector<8x512xf32>
      tpu.vector_store %arg4[%c0_14, %c0_15], %25 {strides = array<i32>} : memref<8x512xf32, #tpu.memory_space<vmem>>, vector<8x512xf32>,
    } else {
    }
    %c2_i32_7 = arith.constant 2 : i32
    %17 = arith.cmpi slt, %13, %c2_i32_7 : i32
    %18 = arith.extui %17 : i1 to i32
    %c0_i32_8 = arith.constant 0 : i32
    %19 = arith.cmpi ne, %18, %c0_i32_8 : i32
    scf.if %19 {
      %23 = tpu.iota {dimensions = array<i32: 0>} : vector<2x8x512xi32>
      %c0_11 = arith.constant 0 : index
      %c0_12 = arith.constant 0 : index
      %24 = vector.load %arg4[%c0_11, %c0_12] : memref<8x512xf32, #tpu.memory_space<vmem>>, vector<8x512xf32>
      %25 = vector.broadcast %13 : i32 to vector<2x8x512xi32>
      %26 = arith.cmpi slt, %23, %25 : vector<2x8x512xi32>
      %cst_13 = arith.constant 0.000000e+00 : f32
      %27 = vector.broadcast %cst_13 : f32 to vector<2x8x512xf32>
      %28 = arith.select %26, %9, %27 : vector<2x8x512xi1>, vector<2x8x512xf32>
      %cst_14 = arith.constant dense<0.000000e+00> : vector<8x512xf32>
      %29 = vector.multi_reduction <add>, %28, %cst_14 [0] : vector<2x8x512xf32> to vector<8x512xf32>
      %30 = arith.addf %24, %29 : vector<8x512xf32>
      %c0_15 = arith.constant 0 : index
      %c0_16 = arith.constant 0 : index
      %31 = vector.load %arg4[%c0_15, %c0_16] : memref<8x512xf32, #tpu.memory_space<vmem>>, vector<8x512xf32>
      tpu.vector_store %arg4[%c0_15, %c0_16], %30 {strides = array<i32>} : memref<8x512xf32, #tpu.memory_space<vmem>>, vector<8x512xf32>,
    } else {
    }
    %c0_i32_9 = arith.constant 0 : i32
    %20 = arith.cmpi eq, %arg1, %c0_i32_9 : i32
    %21 = arith.extui %20 : i1 to i32
    %c0_i32_10 = arith.constant 0 : i32
    %22 = arith.cmpi ne, %21, %c0_i32_10 : i32
    scf.if %22 {
      %c0_11 = arith.constant 0 : index
      %c0_12 = arith.constant 0 : index
      %23 = vector.load %arg4[%c0_11, %c0_12] : memref<8x512xf32, #tpu.memory_space<vmem>>, vector<8x512xf32>
      %24 = vector.shape_cast %23 : vector<8x512xf32> to vector<1x8x512xf32>
      %cst_13 = arith.constant dense<0.000000e+00> : vector<1xf32>
      %25 = vector.multi_reduction <add>, %24, %cst_13 [1, 2] : vector<1x8x512xf32> to vector<1xf32>
      %26 = vector.shape_cast %25 : vector<1xf32> to vector<1x1x1xf32>
      %27 = vector.extract %26[0, 0, 0] : f32 from vector<1x1x1xf32>
      %cst_14 = arith.constant 2.000000e-04 : f32
      %28 = arith.mulf %27, %cst_14 : f32
      %c0_15 = arith.constant 0 : index
      %c0_16 = arith.constant 0 : index
      %29 = memref.load %arg3[%c0_15, %c0_16] : memref<1x1xf32, #tpu.memory_space<smem>>
      memref.store %28, %arg3[%c0_15, %c0_16] : memref<1x1xf32, #tpu.memory_space<smem>>
    } else {
    }
    return
  }
  func.func @transform_0(%arg0: i32, %arg1: i32) -> (i32, i32, i32) {
    %c1_i32 = arith.constant 1 : i32
    %0 = arith.muli %arg0, %c1_i32 : i32
    %1 = arith.addi %0, %arg1 : i32
    %c0_i32 = arith.constant 0 : i32
    %2 = arith.minsi %1, %c0_i32 : i32
    %c0_i32_0 = arith.constant 0 : i32
    %c0_i32_1 = arith.constant 0 : i32
    %c0_i32_2 = arith.constant 0 : i32
    return %2, %c0_i32_0, %c0_i32_1 : i32, i32, i32
  }
  func.func @transform_1(%arg0: i32, %arg1: i32) -> (i32, i32) {
    %c0_i32 = arith.constant 0 : i32
    %c0_i32_0 = arith.constant 0 : i32
    return %arg0, %c0_i32 : i32, i32
  }
}

</mosaic_0001>

<llo_original>
// kernel: tpu_custom_call.1
$region0: #{tpu_custom_call.1}
  #allocation0 [shape = 'u32[]', space=smem, size = 0x4, offset = 0x4, fixed_abs, tag = 'smem constant byte address 0x4 - core index']
  #allocation1 [shape = 'u32[72,128]{1,0:T(1,128)}', space=vmem, size = 0x9000, scoped, tag = 'internal scratch']
  #allocation2 [shape = 'f32[8,512]{1,0:T(8,128)}', space=vmem, size = 0x4000, scoped, tag = 'scratch operand']
  %s0 = inlined_call_operand.hbm [shape: f32[2,8,512], index: 0, kind: input, shape index: {}]
  %s1 = inlined_call_operand.hbm [shape: f32[1,1], index: 1, kind: output, shape index: {}]
  %s2 = sld [smem:[#allocation0]]
  $region34: #{tpu_custom_call.1} parent=0
    _
  %s4 = ssub.s32 1, %s2
  %s5 = scalar_select 0, %s4, %s2
  $region1: #{tpu_custom_call.1} parent=0
    #allocation3 [shape = 'u8[32768]{0}', space=vmem, size = 0x8000, scoped, tag = 'input window, operand 0, single buffered']
    #allocation4 [shape = 's32[1]{0}', space=sflag, size = 0x4, scoped, tag = 'scoped memory for tpu_custom_call.1']
    #allocation5 [shape = 's32[1]{0}', space=sflag, size = 0x4, scoped, tag = 'scoped memory for tpu_custom_call.1']
    #allocation6 [shape = 'u8[512]{0}', space=smem, size = 0x200, scoped, tag = 'output window, operand 0, single buffered']
    %6 = vsyncpa [#allocation4], 0
    %7 = vsyncpa [#allocation5], 0
    // Predicated region
    $region2: #{tpu_custom_call.1} parent=1 // pred_check
      _
    $region3: #{tpu_custom_call.1} parent=1 // pred_check_branch
      %9 = sbr.rel (0) target = $region5
    $region4: #{tpu_custom_call.1} parent=1 // pred_region
      %s10 = sadd.s32 0, 0
      %p11 = scmp.lt.s32.totalorder %s10, 0
      %s12 = scalar_select %p11, %s10, 0
      %s13 = smul.u32 2, %s12
      %15 = vsyncadd [#allocation4], 0
      %s16 = smul.addr %s13, 4
      %s17 = smul.addr %s16, 8
      %s18 = scalar_lea.hbm %s0, %s17
      %s19 = sshll.u32 %s18, 4
      %s20 = int_to_ptr.hbm [resolvable:$true] %s19
      %s21 = sshll.u32 [#allocation3], 4
      %s22 = int_to_ptr.vmem [resolvable:$true] %s21
      %27 = dma.hbm_to_vmem [thread:$0]  %s20, 1024, %s22, [#allocation4], 512, 512, 32
    $region5: #{tpu_custom_call.1} parent=1 // pred_fallthru
      _
    // Predicated region
    $region6: #{tpu_custom_call.1} parent=1 // pred_check
      _
    $region7: #{tpu_custom_call.1} parent=1 // pred_check_branch
      %29 = sbr.rel (0) target = $region9
    $region8: #{tpu_custom_call.1} parent=1 // pred_region
      %31 = dma.done [#allocation4], 1024
    $region9: #{tpu_custom_call.1} parent=1 // pred_fallthru
      _
    %s32 = sadd.s32 0, 0
    %p33 = scmp.lt.s32.totalorder %s32, 0
    %s34 = scalar_select %p33, %s32, 0
    %s35 = smul.u32 2, %s34
    %p36 = scmp.eq.s32.totalorder 0, 0
    // Predicated region
    $region10: #{tpu_custom_call.1} parent=1 // pred_check
      %p37 = pneg %p36
    $region11: #{tpu_custom_call.1} parent=1 // pred_check_branch
      %39 = sbr.rel (%p37) target = $region13
    $region12: #{tpu_custom_call.1} parent=1 // pred_region
      %40 = vst [vmem:[#allocation2] sm:$0xff] 0.0
      %41 = vst [vmem:[#allocation2 + $0x8] sm:$0xff] 0.0
      %42 = vst [vmem:[#allocation2 + $0x10] sm:$0xff] 0.0
      %43 = vst [vmem:[#allocation2 + $0x18] sm:$0xff] 0.0
    $region13: #{tpu_custom_call.1} parent=1 // pred_fallthru
      _
    %v44 = vld [vmem:[#allocation3] sm:$0xff]
    %v45 = vld [vmem:[#allocation3 + $0x8] sm:$0xff]
    %v46 = vld [vmem:[#allocation3 + $0x10] sm:$0xff]
    %v47 = vld [vmem:[#allocation3 + $0x18] sm:$0xff]
    %v48 = vld [vmem:[#allocation3 + $0x20] sm:$0xff]
    %v49 = vld [vmem:[#allocation3 + $0x28] sm:$0xff]
    %v50 = vld [vmem:[#allocation3 + $0x30] sm:$0xff]
    %v51 = vld [vmem:[#allocation3 + $0x38] sm:$0xff]
    %v52 = vadd.f32 %v44, 1e-12
    %v53 = vadd.f32 %v45, 1e-12
    %v54 = vadd.f32 %v46, 1e-12
    %v55 = vadd.f32 %v47, 1e-12
    %v56 = vadd.f32 %v48, 1e-12
    %v57 = vadd.f32 %v49, 1e-12
    %v58 = vadd.f32 %v50, 1e-12
    %v59 = vadd.f32 %v51, 1e-12
    %v60 = vlog2.pop %v52
    %v61 = vmul.f32 %v60, 0.6931472
    %v62 = vlog2.pop %v53
    %v63 = vmul.f32 %v62, 0.6931472
    %v64 = vlog2.pop %v54
    %v65 = vmul.f32 %v64, 0.6931472
    %v66 = vlog2.pop %v55
    %v67 = vmul.f32 %v66, 0.6931472
    %v68 = vlog2.pop %v56
    %v69 = vmul.f32 %v68, 0.6931472
    %v70 = vlog2.pop %v57
    %v71 = vmul.f32 %v70, 0.6931472
    %v72 = vlog2.pop %v58
    %v73 = vmul.f32 %v72, 0.6931472
    %v74 = vlog2.pop %v59
    %v75 = vmul.f32 %v74, 0.6931472
    %v76 = vsub.f32 0.0, %v61
    %v77 = vsub.f32 0.0, %v63
    %v78 = vsub.f32 0.0, %v65
    %v79 = vsub.f32 0.0, %v67
    %v80 = vsub.f32 0.0, %v69
    %v81 = vsub.f32 0.0, %v71
    %v82 = vsub.f32 0.0, %v73
    %v83 = vsub.f32 0.0, %v75
    %v84 = vmul.f32 %v44, %v76
    %v85 = vmul.f32 %v45, %v77
    %v86 = vmul.f32 %v46, %v78
    %v87 = vmul.f32 %v47, %v79
    %v88 = vmul.f32 %v48, %v80
    %v89 = vmul.f32 %v49, %v81
    %v90 = vmul.f32 %v50, %v82
    %v91 = vmul.f32 %v51, %v83
    %s92 = sadd.s32 0, 0
    %s93 = smul.u32 %s92, 2
    %s94 = ssub.s32 2, %s93
    %p95 = scmp.ge.s32.totalorder %s94, 2
    // Predicated region
    $region14: #{tpu_custom_call.1} parent=1 // pred_check
      %p96 = pneg %p95
    $region15: #{tpu_custom_call.1} parent=1 // pred_check_branch
      %98 = sbr.rel (%p96) target = $region17
    $region16: #{tpu_custom_call.1} parent=1 // pred_region
      %v99 = vld [vmem:[#allocation2] sm:$0xff]
      %v100 = vld [vmem:[#allocation2 + $0x8] sm:$0xff]
      %v101 = vld [vmem:[#allocation2 + $0x10] sm:$0xff]
      %v102 = vld [vmem:[#allocation2 + $0x18] sm:$0xff]
      %v103 = vadd.f32 %v84, %v88
      %v104 = vadd.f32 %v85, %v89
      %v105 = vadd.f32 %v86, %v90
      %v106 = vadd.f32 %v87, %v91
      %v107 = vadd.f32 %v99, %v103
      %v108 = vadd.f32 %v100, %v104
      %v109 = vadd.f32 %v101, %v105
      %v110 = vadd.f32 %v102, %v106
      %111 = vst [vmem:[#allocation2] sm:$0xff] %v107
      %112 = vst [vmem:[#allocation2 + $0x8] sm:$0xff] %v108
      %113 = vst [vmem:[#allocation2 + $0x10] sm:$0xff] %v109
      %114 = vst [vmem:[#allocation2 + $0x18] sm:$0xff] %v110
    $region17: #{tpu_custom_call.1} parent=1 // pred_fallthru
      _
    %p115 = scmp.lt.s32.totalorder %s94, 2
    // Predicated region
    $region18: #{tpu_custom_call.1} parent=1 // pred_check
      %p116 = pneg %p115
    $region19: #{tpu_custom_call.1} parent=1 // pred_check_branch
      %118 = sbr.rel (%p116) target = $region21
    $region20: #{tpu_custom_call.1} parent=1 // pred_region
      %v119 = vld [vmem:[#allocation2] sm:$0xff]
      %v120 = vld [vmem:[#allocation2 + $0x8] sm:$0xff]
      %v121 = vld [vmem:[#allocation2 + $0x10] sm:$0xff]
      %v122 = vld [vmem:[#allocation2 + $0x18] sm:$0xff]
      %v123 = vstv %s94
      %vm124 = vcmp.gt.s32.totalorder %v123, 0
      %vm125 = vcmp.gt.s32.totalorder %v123, 1
      %v126 = vsel %vm124, %v84, 0.0
      %v127 = vsel %vm124, %v85, 0.0
      %v128 = vsel %vm124, %v86, 0.0
      %v129 = vsel %vm124, %v87, 0.0
      %v130 = vsel %vm125, %v88, 0.0
      %v131 = vsel %vm125, %v89, 0.0
      %v132 = vsel %vm125, %v90, 0.0
      %v133 = vsel %vm125, %v91, 0.0
      %v134 = vadd.f32 %v126, %v130
      %v135 = vadd.f32 %v127, %v131
      %v136 = vadd.f32 %v128, %v132
      %v137 = vadd.f32 %v129, %v133
      %v138 = vadd.f32 %v119, %v134
      %v139 = vadd.f32 %v120, %v135
      %v140 = vadd.f32 %v121, %v136
      %v141 = vadd.f32 %v122, %v137
      %142 = vst [vmem:[#allocation2] sm:$0xff] %v138
      %143 = vst [vmem:[#allocation2 + $0x8] sm:$0xff] %v139
      %144 = vst [vmem:[#allocation2 + $0x10] sm:$0xff] %v140
      %145 = vst [vmem:[#allocation2 + $0x18] sm:$0xff] %v141
    $region21: #{tpu_custom_call.1} parent=1 // pred_fallthru
      _
    // Predicated region
    $region22: #{tpu_custom_call.1} parent=1 // pred_check
      %p146 = pneg %p36
    $region23: #{tpu_custom_call.1} parent=1 // pred_check_branch
      %148 = sbr.rel (%p146) target = $region25
    $region24: #{tpu_custom_call.1} parent=1 // pred_region
      %v149 = vld [vmem:[#allocation2] sm:$0xff]
      %v150 = vld [vmem:[#allocation2 + $0x8] sm:$0xff]
      %v151 = vld [vmem:[#allocation2 + $0x10] sm:$0xff]
      %v152 = vld [vmem:[#allocation2 + $0x18] sm:$0xff]
      %v153 = vadd.f32 %v149, %v150
      %v154 = vadd.f32 %v153, %v151
      %v155 = vadd.f32 %v154, %v152
      %156 = vadd.xlane.f32.xlu0 %v155
      %v157 = vpop.xlane.xlu0 %156
      %v158 = vrot.slane %v157, 4
      %v159 = vadd.f32 %v157, %v158
      %v160 = vrot.slane %v159, 2
      %v161 = vadd.f32 %v159, %v160
      %v162 = vrot.slane %v161, 1
      %v163 = vadd.f32 %v161, %v162
      %s164 = vtos %v163
      %s165 = smul.f32 %s164, 0.0002
      %s166 = scalar_lea.smem [#allocation6], 0
      %167 = sst [smem:[%s166]] %s165
    $region25: #{tpu_custom_call.1} parent=1 // pred_fallthru
      _
    // Predicated region
    $region26: #{tpu_custom_call.1} parent=1 // pred_check
      _
    $region27: #{tpu_custom_call.1} parent=1 // pred_check_branch
      %169 = sbr.rel (0) target = $region29
    $region28: #{tpu_custom_call.1} parent=1 // pred_region
      %171 = vsyncadd [#allocation5], 0
      %s173 = sshll.u32 %s1, 4
      %s174 = int_to_ptr.hbm [resolvable:$true] %s173
      %176 = dma.smem_to_hbm [#allocation6], 16, %s174, [#allocation5]
    $region29: #{tpu_custom_call.1} parent=1 // pred_fallthru
      _
    // Predicated region
    $region30: #{tpu_custom_call.1} parent=1 // pred_check
      _
    $region31: #{tpu_custom_call.1} parent=1 // pred_check_branch
      %178 = sbr.rel (0) target = $region33
    $region32: #{tpu_custom_call.1} parent=1 // pred_region
      %180 = dma.done [#allocation5], 16
    $region33: #{tpu_custom_call.1} parent=1 // pred_fallthru
      _
    %181 = sfence
    %182 = vsyncpa [#allocation4], 1
    %183 = vsyncpa [#allocation5], 1

</llo_original>
